<compile_context>
chip_gen: v7x
topology: tpu7x:2x2x1
jax: 0.10.0
libtpu: 0.0.40
codegen_flags: <defaults>
</compile_context>

<pallas_src>
import jax
import jax.numpy as jnp
from jax import lax
from jax.experimental import pallas as pl
from jax.experimental.pallas import tpu as pltpu

LANES = 128
MAX_BLOCK_ROWS = 8192       # 8192 x 128 f32 = 4 MiB per input per grid step
CONFIDENCE_MARGIN = 5.0


def _deviation_loss_kernel(stats_ref, nvalid_ref, yp_ref, yt_ref, out_ref,
                           acc_ref):
    step = pl.program_id(0)
    last = pl.num_programs(0) - 1

    @pl.when(step == 0)
    def _():
        acc_ref[...] = jnp.zeros_like(acc_ref)

    mu = stats_ref[0]            # mean(ref)
    margin_x_std = stats_ref[1]  # 5.0 * std(ref)

    yp = yp_ref[...].astype(jnp.float32)   # native dtype (f32/bf16) upcast here
    yt = yt_ref[...].astype(jnp.float32)

    # Unscaled deviation: d = std * dev.  inlier/outlier are both linear in
    # std, so the 1/std factor is applied once in the epilogue.
    d = yp - mu
    inlier = jnp.abs(d)
    outlier = jnp.maximum(margin_x_std - d, 0.0)
    # Exact blend (1-y)*inlier + y*outlier, valid for soft labels too.
    dev_loss = inlier + yt * (outlier - inlier)

    # Per-lane partial sums; defer the cross-lane reduce to the epilogue.
    @pl.when(step != last)
    def _():
        acc_ref[...] += jnp.sum(dev_loss, axis=0, keepdims=True)

    # Only the last grid step can contain invalid (out-of-range) elements:
    # mask them by global flat index, then finalize.
    @pl.when(step == last)
    def _():
        block_rows = dev_loss.shape[0]
        row = lax.broadcasted_iota(jnp.int32, dev_loss.shape, 0)
        lane = lax.broadcasted_iota(jnp.int32, dev_loss.shape, 1)
        idx = (step * block_rows + row) * LANES + lane
        masked = jnp.where(idx < nvalid_ref[0], dev_loss, 0.0)
        acc_ref[...] += jnp.sum(masked, axis=0, keepdims=True)
        # scale = 1 / (std * N): applies both the deviation scaling and the mean.
        out_ref[0, 0] = jnp.sum(acc_ref[...]) * stats_ref[2]


def deviation_loss(y_pred, y_true, ref_key, *, max_block_rows=MAX_BLOCK_ROWS):
    """Pallas implementation of DeviationLoss.forward.

    y_pred, y_true: arrays of identical shape (e.g. (B, 1)); y_true may be
    binary or soft in [0, 1].  ref_key: PRNG key for the 5000 reference
    Gaussians (torch.normal inside forward -> deterministic here).
    """
    assert y_pred.shape == y_true.shape

    # Reference Gaussian statistics (glue, not the hot path).
    ref = jax.random.normal(ref_key, (5000,), dtype=jnp.float32)
    mu = jnp.mean(ref)
    std = jnp.std(ref, ddof=1)  # torch.std is unbiased by default
    n_total = int(y_pred.size)

    stats = jnp.stack(
        [mu, CONFIDENCE_MARGIN * std, 1.0 / (std * n_total)]
    ).astype(jnp.float32)
    nvalid = jnp.array([n_total], dtype=jnp.int32)

    # Lane-dense (rows, 128) view.  The reshape is free when n_total % 128 == 0
    # (the common case); otherwise pad at most 127 elements so the 2-D view
    # exists at all -- pad values are masked out inside the kernel.
    yp = y_pred.reshape(-1)
    yt = y_true.reshape(-1)
    rows = pl.cdiv(n_total, LANES)
    padded = rows * LANES
    if padded != n_total:
        # TODO(synk): sub-128 tail still requires this tiny wrapper pad.
        yp = jnp.pad(yp, (0, padded - n_total))
        yt = jnp.pad(yt, (0, padded - n_total))
    yp = yp.reshape(rows, LANES)
    yt = yt.reshape(rows, LANES)

    if rows <= max_block_rows:
        block_rows = rows            # single full-extent block (any row count)
        num_steps = 1
    else:
        block_rows = max_block_rows  # multiple of 8; last block may be partial
        num_steps = pl.cdiv(rows, block_rows)

    out = pl.pallas_call(
        _deviation_loss_kernel,
        out_shape=jax.ShapeDtypeStruct((1, 1), jnp.float32),
        grid=(num_steps,),
        in_specs=[
            pl.BlockSpec(memory_space=pltpu.SMEM),                # mu, 5*std, 1/(std*N)
            pl.BlockSpec(memory_space=pltpu.SMEM),                # valid element count
            pl.BlockSpec((block_rows, LANES), lambda i: (i, 0)),  # y_pred tile
            pl.BlockSpec((block_rows, LANES), lambda i: (i, 0)),  # y_true tile
        ],
        out_specs=pl.BlockSpec(memory_space=pltpu.SMEM),          # scalar loss
        scratch_shapes=[pltpu.VMEM((1, LANES), jnp.float32)],     # per-lane sums
        compiler_params=pltpu.CompilerParams(
            dimension_semantics=("arbitrary",),
            vmem_limit_bytes=32 * 1024 * 1024),
    )(stats, nvalid, yp, yt)

    return out[0, 0]


def _reference(y_pred, y_true, ref_key):
    ref = jax.random.normal(ref_key, (5000,), dtype=jnp.float32)
    mu = jnp.mean(ref)
    std = jnp.std(ref, ddof=1)
    dev = (y_pred.astype(jnp.float32) - mu) / std
    inlier = jnp.abs(dev)
    outlier = jnp.maximum(CONFIDENCE_MARGIN - dev, 0.0)
    y = y_true.astype(jnp.float32)
    return jnp.mean((1.0 - y) * inlier + y * outlier)


if __name__ == "__main__":
    key = jax.random.PRNGKey(0)
    k_pred, k_true, k_ref = jax.random.split(key, 3)

    # 1) Aligned batch (single block, free reshape, no wrapper copies).
    B = 256
    y_pred = jax.random.normal(k_pred, (B, 1), dtype=jnp.float32) * 2.0
    y_true = (jax.random.uniform(k_true, (B, 1)) < 0.1).astype(jnp.float32)
    loss = jax.block_until_ready(deviation_loss(y_pred, y_true, k_ref))
    ref_loss = jax.block_until_ready(_reference(y_pred, y_true, k_ref))
    assert jnp.allclose(loss, ref_loss, rtol=1e-5, atol=1e-5), (loss, ref_loss)

    # 2) Non-aligned batch + soft labels: exercises in-kernel tail masking and
    #    the exact (1-y)*inlier + y*outlier blend.
    B2 = 300
    y_pred2 = jax.random.normal(k_pred, (B2, 1), dtype=jnp.float32) * 3.0
    y_true2 = jax.random.uniform(k_true, (B2, 1), dtype=jnp.float32)
    loss2 = jax.block_until_ready(deviation_loss(y_pred2, y_true2, k_ref))
    ref_loss2 = jax.block_until_ready(_reference(y_pred2, y_true2, k_ref))
    assert jnp.allclose(loss2, ref_loss2, rtol=1e-5, atol=1e-5), (loss2, ref_loss2)

    # 3) Multi-step grid path (accumulator across grid steps) at small size by
    #    shrinking the block-row cap; includes a non-multiple-of-128 tail.
    B3 = 2000
    y_pred3 = jax.random.normal(k_pred, (B3, 1), dtype=jnp.float32)
    y_true3 = (jax.random.uniform(k_true, (B3, 1)) < 0.2).astype(jnp.float32)
    loss3 = jax.block_until_ready(
        deviation_loss(y_pred3, y_true3, k_ref, max_block_rows=8))
    ref_loss3 = jax.block_until_ready(_reference(y_pred3, y_true3, k_ref))
    assert jnp.allclose(loss3, ref_loss3, rtol=1e-5, atol=1e-5), (loss3, ref_loss3)

    print("KERNEL_OK")
</pallas_src>

<mosaic_0001>
module attributes {stable_mosaic.version = 11 : i64} {
  func.func @_deviation_loss_kernel(%arg0: i32, %arg1: memref<3xf32, #tpu.memory_space<smem>>, %arg2: memref<1xi32, #tpu.memory_space<smem>>, %arg3: memref<2x128xf32, #tpu.memory_space<vmem>>, %arg4: memref<2x128xf32, #tpu.memory_space<vmem>>, %arg5: memref<1x1xf32, #tpu.memory_space<smem>>, %arg6: memref<1x128xf32, #tpu.memory_space<vmem>>) attributes {dimension_semantics = [#tpu.dimension_semantics<arbitrary>], iteration_bounds = array<i64: 1>, scalar_prefetch = 0 : i64, scratch_operands = 1 : i64, tpu.core_type = #tpu.core_type<tc>, window_params = [{transform_indices = @transform_0, window_bounds = array<i64: 3>}, {transform_indices = @transform_1, window_bounds = array<i64: 1>}, {transform_indices = @transform_2, window_bounds = array<i64: 2, 128>}, {transform_indices = @transform_3, window_bounds = array<i64: 2, 128>}, {transform_indices = @transform_4, window_bounds = array<i64: 1, 1>}]} {
    %c0_i32 = arith.constant 0 : i32
    %0 = arith.cmpi eq, %arg0, %c0_i32 : i32
    %1 = arith.extui %0 : i1 to i32
    %c0_i32_0 = arith.constant 0 : i32
    %2 = arith.cmpi ne, %1, %c0_i32_0 : i32
    scf.if %2 {
      %cst_9 = arith.constant 0.000000e+00 : f32
      %23 = vector.broadcast %cst_9 : f32 to vector<1x128xf32>
      %c0_10 = arith.constant 0 : index
      %c0_11 = arith.constant 0 : index
      %24 = vector.load %arg6[%c0_10, %c0_11] : memref<1x128xf32, #tpu.memory_space<vmem>>, vector<1x128xf32>
      tpu.vector_store %arg6[%c0_10, %c0_11], %23 {strides = array<i32>} : memref<1x128xf32, #tpu.memory_space<vmem>>, vector<1x128xf32>,
    } else {
    }
    %c0 = arith.constant 0 : index
    %3 = memref.load %arg1[%c0] : memref<3xf32, #tpu.memory_space<smem>>
    %c1 = arith.constant 1 : index
    %4 = memref.load %arg1[%c1] : memref<3xf32, #tpu.memory_space<smem>>
    %c0_1 = arith.constant 0 : index
    %c0_2 = arith.constant 0 : index
    %5 = vector.load %arg3[%c0_1, %c0_2] : memref<2x128xf32, #tpu.memory_space<vmem>>, vector<2x128xf32>
    %c0_3 = arith.constant 0 : index
    %c0_4 = arith.constant 0 : index
    %6 = vector.load %arg4[%c0_3, %c0_4] : memref<2x128xf32, #tpu.memory_space<vmem>>, vector<2x128xf32>
    %7 = vector.broadcast %3 : f32 to vector<2x128xf32>
    %8 = arith.subf %5, %7 : vector<2x128xf32>
    %9 = math.absf %8 : vector<2x128xf32>
    %10 = vector.broadcast %4 : f32 to vector<2x128xf32>
    %11 = arith.subf %10, %8 : vector<2x128xf32>
    %cst = arith.constant 0.000000e+00 : f32
    %12 = vector.broadcast %cst : f32 to vector<2x128xf32>
    %13 = arith.maximumf %11, %12 : vector<2x128xf32>
    %14 = arith.subf %13, %9 : vector<2x128xf32>
    %15 = arith.mulf %6, %14 : vector<2x128xf32>
    %16 = arith.addf %9, %15 : vector<2x128xf32>
    %c0_i32_5 = arith.constant 0 : i32
    %17 = arith.cmpi ne, %arg0, %c0_i32_5 : i32
    %18 = arith.extui %17 : i1 to i32
    %c0_i32_6 = arith.constant 0 : i32
    %19 = arith.cmpi ne, %18, %c0_i32_6 : i32
    scf.if %19 {
      %c0_9 = arith.constant 0 : index
      %c0_10 = arith.constant 0 : index
      %23 = vector.load %arg6[%c0_9, %c0_10] : memref<1x128xf32, #tpu.memory_space<vmem>>, vector<1x128xf32>
      %cst_11 = arith.constant dense<0.000000e+00> : vector<128xf32>
      %24 = vector.multi_reduction <add>, %16, %cst_11 [0] : vector<2x128xf32> to vector<128xf32>
      %25 = vector.shape_cast %24 : vector<128xf32> to vector<1x128xf32>
      %26 = arith.addf %23, %25 : vector<1x128xf32>
      %c0_12 = arith.constant 0 : index
      %c0_13 = arith.constant 0 : index
      %27 = vector.load %arg6[%c0_12, %c0_13] : memref<1x128xf32, #tpu.memory_space<vmem>>, vector<1x128xf32>
      tpu.vector_store %arg6[%c0_12, %c0_13], %26 {strides = array<i32>} : memref<1x128xf32, #tpu.memory_space<vmem>>, vector<1x128xf32>,
    } else {
    }
    %c0_i32_7 = arith.constant 0 : i32
    %20 = arith.cmpi eq, %arg0, %c0_i32_7 : i32
    %21 = arith.extui %20 : i1 to i32
    %c0_i32_8 = arith.constant 0 : i32
    %22 = arith.cmpi ne, %21, %c0_i32_8 : i32
    scf.if %22 {
      %23 = tpu.iota {dimensions = array<i32: 0>} : vector<2x128xi32>
      %24 = tpu.iota {dimensions = array<i32: 1>} : vector<2x128xi32>
      %c2_i32 = arith.constant 2 : i32
      %25 = arith.muli %arg0, %c2_i32 : i32
      %26 = vector.broadcast %25 : i32 to vector<2x128xi32>
      %27 = arith.addi %26, %23 : vector<2x128xi32>
      %c128_i32 = arith.constant 128 : i32
      %28 = vector.broadcast %c128_i32 : i32 to vector<2x128xi32>
      %29 = arith.muli %27, %28 : vector<2x128xi32>
      %30 = arith.addi %29, %24 : vector<2x128xi32>
      %c0_9 = arith.constant 0 : index
      %31 = memref.load %arg2[%c0_9] : memref<1xi32, #tpu.memory_space<smem>>
      %32 = vector.broadcast %31 : i32 to vector<2x128xi32>
      %33 = arith.cmpi slt, %30, %32 : vector<2x128xi32>
      %cst_10 = arith.constant 0.000000e+00 : f32
      %34 = vector.broadcast %cst_10 : f32 to vector<2x128xf32>
      %35 = arith.select %33, %16, %34 : vector<2x128xi1>, vector<2x128xf32>
      %c0_11 = arith.constant 0 : index
      %c0_12 = arith.constant 0 : index
      %36 = vector.load %arg6[%c0_11, %c0_12] : memref<1x128xf32, #tpu.memory_space<vmem>>, vector<1x128xf32>
      %cst_13 = arith.constant dense<0.000000e+00> : vector<128xf32>
      %37 = vector.multi_reduction <add>, %35, %cst_13 [0] : vector<2x128xf32> to vector<128xf32>
      %38 = vector.shape_cast %37 : vector<128xf32> to vector<1x128xf32>
      %39 = arith.addf %36, %38 : vector<1x128xf32>
      %c0_14 = arith.constant 0 : index
      %c0_15 = arith.constant 0 : index
      %40 = vector.load %arg6[%c0_14, %c0_15] : memref<1x128xf32, #tpu.memory_space<vmem>>, vector<1x128xf32>
      tpu.vector_store %arg6[%c0_14, %c0_15], %39 {strides = array<i32>} : memref<1x128xf32, #tpu.memory_space<vmem>>, vector<1x128xf32>,
      %c0_16 = arith.constant 0 : index
      %c0_17 = arith.constant 0 : index
      %41 = vector.load %arg6[%c0_16, %c0_17] : memref<1x128xf32, #tpu.memory_space<vmem>>, vector<1x128xf32>
      %42 = vector.shape_cast %41 : vector<1x128xf32> to vector<1x1x128xf32>
      %cst_18 = arith.constant dense<0.000000e+00> : vector<1xf32>
      %43 = vector.multi_reduction <add>, %42, %cst_18 [1, 2] : vector<1x1x128xf32> to vector<1xf32>
      %44 = vector.shape_cast %43 : vector<1xf32> to vector<1x1x1xf32>
      %45 = vector.extract %44[0, 0, 0] : f32 from vector<1x1x1xf32>
      %c2 = arith.constant 2 : index
      %46 = memref.load %arg1[%c2] : memref<3xf32, #tpu.memory_space<smem>>
      %47 = arith.mulf %45, %46 : f32
      %c0_19 = arith.constant 0 : index
      %c0_20 = arith.constant 0 : index
      %48 = memref.load %arg5[%c0_19, %c0_20] : memref<1x1xf32, #tpu.memory_space<smem>>
      memref.store %47, %arg5[%c0_19, %c0_20] : memref<1x1xf32, #tpu.memory_space<smem>>
    } else {
    }
    return
  }
  func.func @transform_0(%arg0: i32) -> i32 {
    %c0_i32 = arith.constant 0 : i32
    %c0_i32_0 = arith.constant 0 : i32
    return %c0_i32 : i32
  }
  func.func @transform_1(%arg0: i32) -> i32 {
    %c0_i32 = arith.constant 0 : i32
    %c0_i32_0 = arith.constant 0 : i32
    return %c0_i32 : i32
  }
  func.func @transform_2(%arg0: i32) -> (i32, i32) {
    %c0_i32 = arith.constant 0 : i32
    %c0_i32_0 = arith.constant 0 : i32
    return %arg0, %c0_i32 : i32, i32
  }
  func.func @transform_3(%arg0: i32) -> (i32, i32) {
    %c0_i32 = arith.constant 0 : i32
    %c0_i32_0 = arith.constant 0 : i32
    return %arg0, %c0_i32 : i32, i32
  }
  func.func @transform_4(%arg0: i32) -> (i32, i32) {
    %c0_i32 = arith.constant 0 : i32
    %c0_i32_0 = arith.constant 0 : i32
    %c0_i32_1 = arith.constant 0 : i32
    return %c0_i32, %c0_i32_0 : i32, i32
  }
}

</mosaic_0001>

<llo_original>
// kernel: tpu_custom_call.1
$region0: #{tpu_custom_call.1}
  #allocation0 [shape = 'u32[]', space=smem, size = 0x4, offset = 0x4, fixed_abs, tag = 'smem constant byte address 0x4 - core index']
  #allocation1 [shape = 'u32[144,128]{1,0:T(1,128)}', space=vmem, size = 0x12000, scoped, tag = 'internal scratch']
  #allocation2 [shape = 'f32[1,128]{1,0:T(1,128)}', space=vmem, size = 0x200, scoped, tag = 'scratch operand']
  #allocation3 [shape = 's32[1]{0:T(128)S(6)}', space=smem, size = 0x200, scoped, tag = 'scoped memory for tpu_custom_call.1']
  %s0 = inlined_call_operand.vmem [shape: f32[3], index: 0, kind: input, shape index: {}]
  %s1 = inlined_call_operand.<no memory space> [shape: s32[1], index: 1, kind: input, shape index: {}]
  %s2 = inlined_call_operand.vmem [shape: f32[2,128], index: 2, kind: input, shape index: {}]
  %s3 = inlined_call_operand.vmem [shape: f32[2,128], index: 3, kind: input, shape index: {}]
  %s4 = inlined_call_operand.hbm [shape: f32[1,1], index: 4, kind: output, shape index: {}]
  %s5 = sld [smem:[#allocation0]]
  $region42: #{tpu_custom_call.1} parent=0
    _
  %s7 = ssub.s32 1, %s5
  %s8 = scalar_select 0, %s7, %s5
  %9 = sst [smem:[#allocation3]] %s1
  $region1: #{tpu_custom_call.1} parent=0
    #allocation4 [shape = 'u8[512]{0}', space=smem, size = 0x200, scoped, tag = 'input window, operand 0, single buffered']
    #allocation5 [shape = 's32[1]{0}', space=sflag, size = 0x4, scoped, tag = 'scoped memory for tpu_custom_call.1']
    #allocation6 [shape = 's32[1]{0}', space=sflag, size = 0x4, scoped, tag = 'scoped memory for tpu_custom_call.1']
    #allocation7 [shape = 'u8[512]{0}', space=smem, size = 0x200, scoped, tag = 'output window, operand 0, single buffered']
    %10 = vsyncpa [#allocation6], 0
    %11 = vsyncpa [#allocation5], 0
    // Predicated region
    $region2: #{tpu_custom_call.1} parent=1 // pred_check
      _
    $region3: #{tpu_custom_call.1} parent=1 // pred_check_branch
      %13 = sbr.rel (0) target = $region5
    $region4: #{tpu_custom_call.1} parent=1 // pred_region
      %s15 = ssub.s32 16, 16
      %16 = vsyncadd [#allocation6], %s15
      %s18 = sshll.u32 %s0, 4
      %s19 = int_to_ptr.vmem [resolvable:$true] %s18
      %21 = dma.vmem_to_smem %s19, 16, [#allocation4], [#allocation6]
    $region5: #{tpu_custom_call.1} parent=1 // pred_fallthru
      _
    // Predicated region
    $region6: #{tpu_custom_call.1} parent=1 // pred_check
      _
    $region7: #{tpu_custom_call.1} parent=1 // pred_check_branch
      %23 = sbr.rel (0) target = $region9
    $region8: #{tpu_custom_call.1} parent=1 // pred_region
      _
    $region9: #{tpu_custom_call.1} parent=1 // pred_fallthru
      _
    // Predicated region
    $region10: #{tpu_custom_call.1} parent=1 // pred_check
      _
    $region11: #{tpu_custom_call.1} parent=1 // pred_check_branch
      %25 = sbr.rel (0) target = $region13
    $region12: #{tpu_custom_call.1} parent=1 // pred_region
      _
    $region13: #{tpu_custom_call.1} parent=1 // pred_fallthru
      _
    // Predicated region
    $region14: #{tpu_custom_call.1} parent=1 // pred_check
      _
    $region15: #{tpu_custom_call.1} parent=1 // pred_check_branch
      %27 = sbr.rel (0) target = $region17
    $region16: #{tpu_custom_call.1} parent=1 // pred_region
      _
    $region17: #{tpu_custom_call.1} parent=1 // pred_fallthru
      _
    // Predicated region
    $region18: #{tpu_custom_call.1} parent=1 // pred_check
      _
    $region19: #{tpu_custom_call.1} parent=1 // pred_check_branch
      %29 = sbr.rel (0) target = $region21
    $region20: #{tpu_custom_call.1} parent=1 // pred_region
      %30 = dma.done [#allocation6], 16
    $region21: #{tpu_custom_call.1} parent=1 // pred_fallthru
      _
    %31 = sfence
    %p32 = scmp.eq.s32.totalorder 0, 0
    // Predicated region
    $region22: #{tpu_custom_call.1} parent=1 // pred_check
      %p33 = pneg %p32
    $region23: #{tpu_custom_call.1} parent=1 // pred_check_branch
      %35 = sbr.rel (%p33) target = $region25
    $region24: #{tpu_custom_call.1} parent=1 // pred_region
      %36 = vst [vmem:[#allocation2] sm:$0x1] 0.0
    $region25: #{tpu_custom_call.1} parent=1 // pred_fallthru
      _
    %s37 = sld [smem:[#allocation4]]
    %s38 = sld [smem:[#allocation4 + $0x1]]
    %v39 = vld [vmem:[%s2] sm:$0x3]
    %v40 = vld [vmem:[%s3] sm:$0x3]
    %v41 = vstv %s37
    %v42 = vsub.f32 %v39, %v41
    %v43 = vand.u32 2147483647, %v42
    %v44 = vstv %s38
    %v45 = vsub.f32 %v44, %v42
    %v46 = vmax.f32 %v45, 0.0
    %v47 = vsub.f32 %v46, %v43
    %v48 = vmul.f32 %v40, %v47
    %v49 = vadd.f32 %v43, %v48
    %p50 = scmp.ne.s32.totalorder 0, 0
    // Predicated region
    $region26: #{tpu_custom_call.1} parent=1 // pred_check
      %p51 = pneg %p50
    $region27: #{tpu_custom_call.1} parent=1 // pred_check_branch
      %53 = sbr.rel (%p51) target = $region29
    $region28: #{tpu_custom_call.1} parent=1 // pred_region
      %v54 = vld [vmem:[#allocation2] sm:$0x1]
      %vm55 = vcmask 1041408
      %v56 = vsel %vm55, %v49, 0.0
      %v57 = vrot.slane %v56, 4
      %v58 = vadd.f32 %v56, %v57
      %v59 = vrot.slane %v58, 2
      %v60 = vadd.f32 %v58, %v59
      %v61 = vrot.slane %v60, 1
      %v62 = vadd.f32 %v60, %v61
      %v63 = vadd.f32 %v54, %v62
      %64 = vst [vmem:[#allocation2] sm:$0x1] %v63
    $region29: #{tpu_custom_call.1} parent=1 // pred_fallthru
      _
    // Predicated region
    $region30: #{tpu_custom_call.1} parent=1 // pred_check
      %p65 = pneg %p32
    $region31: #{tpu_custom_call.1} parent=1 // pred_check_branch
      %67 = sbr.rel (%p65) target = $region33
    $region32: #{tpu_custom_call.1} parent=1 // pred_region
      %v68 = vlaneseq
      %v69 = vshrl.u32 %v68, 7
      %v70 = vlaneseq
      %v71 = vand.u32 %v70, 127
      %s72 = smul.u32 0, 2
      %v73 = vstv %s72
      %v74 = vadd.s32 %v73, %v69
      %v75 = vmul.u32 %v74, 128
      %v76 = vadd.s32 %v75, %v71
      %s77 = sld [smem:[#allocation3]]
      %v78 = vstv %s77
      %vm79 = vcmp.lt.s32.totalorder %v76, %v78
      %v80 = vsel %vm79, %v49, 0.0
      %v81 = vld [vmem:[#allocation2] sm:$0x1]
      %vm82 = vcmask 1041408
      %v83 = vsel %vm82, %v80, 0.0
      %v84 = vrot.slane %v83, 4
      %v85 = vadd.f32 %v83, %v84
      %v86 = vrot.slane %v85, 2
      %v87 = vadd.f32 %v85, %v86
      %v88 = vrot.slane %v87, 1
      %v89 = vadd.f32 %v87, %v88
      %v90 = vadd.f32 %v81, %v89
      %91 = vst [vmem:[#allocation2] sm:$0x1] %v90
      %v92 = vld [vmem:[#allocation2] sm:$0x1]
      %vm93 = vcmask 1040384
      %v94 = vsel %vm93, %v92, 0.0
      %95 = vadd.xlane.f32.xlu0 %v94
      %v96 = vpop.xlane.xlu0 %95
      %v97 = vrot.slane %v96, 4
      %v98 = vadd.f32 %v96, %v97
      %v99 = vrot.slane %v98, 2
      %v100 = vadd.f32 %v98, %v99
      %v101 = vrot.slane %v100, 1
      %v102 = vadd.f32 %v100, %v101
      %s103 = vtos %v102
      %s104 = sld [smem:[#allocation4 + $0x2]]
      %s105 = smul.f32 %s103, %s104
      %s106 = scalar_lea.smem [#allocation7], 0
      %107 = sst [smem:[%s106]] %s105
    $region33: #{tpu_custom_call.1} parent=1 // pred_fallthru
      _
    // Predicated region
    $region34: #{tpu_custom_call.1} parent=1 // pred_check
      _
    $region35: #{tpu_custom_call.1} parent=1 // pred_check_branch
      %109 = sbr.rel (0) target = $region37
    $region36: #{tpu_custom_call.1} parent=1 // pred_region
      %s111 = ssub.s32 16, 16
      %112 = vsyncadd [#allocation5], %s111
      %115 = dma.smem_to_hbm [#allocation7], 16, %s4, [#allocation5]
    $region37: #{tpu_custom_call.1} parent=1 // pred_fallthru
      _
    // Predicated region
    $region38: #{tpu_custom_call.1} parent=1 // pred_check
      _
    $region39: #{tpu_custom_call.1} parent=1 // pred_check_branch
      %117 = sbr.rel (0) target = $region41
    $region40: #{tpu_custom_call.1} parent=1 // pred_region
      %118 = dma.done [#allocation5], 16
    $region41: #{tpu_custom_call.1} parent=1 // pred_fallthru
      _
    %119 = sfence
    %120 = vsyncpa [#allocation5], 1
    %121 = vsyncpa [#allocation6], 1

</llo_original>
